<compile_context>
chip_gen: v7x
topology: tpu7x:2x2x1
jax: 0.10.0
libtpu: 0.0.40
codegen_flags: <defaults>
</compile_context>

<pallas_src>
import math
import functools

import jax
import jax.numpy as jnp
from jax.experimental import pallas as pl
from jax.experimental.pallas import tpu as pltpu


def _round_up(n, m):
    return ((n + m - 1) // m) * m


def _t5_rel_bias_kernel(emb_ref, o_ref, *, causal, num_buckets, max_distance,
                        t1_blk, t2_blk, strip_w):
    """One (t1_blk, t2_blk) output tile of the T5 relative-position bias.

    emb_ref: SMEM, (num_buckets,) float32, already multiplied by `scale`.
    """
    i0 = pl.program_id(0) * t1_blk
    j0 = pl.program_id(1) * t2_blk
    diag = i0 - j0                       # n = (i - j) for the tile's (0, 0) corner
    n_min = diag - (t2_blk - 1)
    n_max = diag + (t1_blk - 1)

    nb = num_buckets if causal else num_buckets // 2

    # ---- constant-tile fast path -------------------------------------------
    # Saturation is exact: for n >= max_distance the log term is >= nb before the
    # clamp regardless of log rounding, so every element maps to bucket nb-1 (plus
    # the sign offset for the non-causal negative side); for causal n <= 0 every
    # element maps to bucket 0.
    if causal:
        low_sat = n_max <= 0                      # all future -> bucket 0
        high_sat = n_min >= max_distance          # all far past -> bucket nb-1
        const_val = jnp.where(low_sat, emb_ref[0], emb_ref[num_buckets - 1])
    else:
        high_sat = n_min >= max_distance          # far past  -> bucket nb-1
        low_sat = n_max <= -max_distance          # far future -> bucket num_buckets-1
        const_val = jnp.where(high_sat, emb_ref[nb - 1], emb_ref[num_buckets - 1])
    is_const = jnp.logical_or(low_sat, high_sat)

    @pl.when(is_const)
    def _fast():
        o_ref[...] = jnp.full((t1_blk, t2_blk), const_val, o_ref.dtype)

    # ---- Toeplitz slow path -------------------------------------------------
    @pl.when(jnp.logical_not(is_const))
    def _slow():
        # strip[s, d] holds bias(n) for n = diag + (t1_blk - 8) + s - d.
        # Output row-group r (rows 8r..8r+7) is strip[:, off_r : off_r + t2_blk]
        # with off_r = t1_blk - 8 - 8r.
        base = diag + (t1_blk - 8)
        s = jax.lax.broadcasted_iota(jnp.int32, (8, strip_w), 0)
        d = jax.lax.broadcasted_iota(jnp.int32, (8, strip_w), 1)
        n = base + s - d                           # n = q_pos - k_pos

        if causal:
            ret = jnp.zeros_like(n)
            n = jnp.maximum(n, 0)
        else:
            ret = jnp.where(n < 0, jnp.int32(nb), jnp.int32(0))
            n = jnp.abs(n)

        max_exact = nb // 2
        is_small = n < max_exact

        # Guard n == 0 so log stays finite; that branch is discarded by is_small.
        n_f = jnp.maximum(n.astype(jnp.float32), 1.0)
        val_if_large = max_exact + (
            jnp.log(n_f / max_exact)
            / math.log(max_distance / max_exact)
            * (nb - max_exact)
        ).astype(jnp.int32)                        # trunc-toward-zero == .long()
        val_if_large = jnp.minimum(val_if_large, nb - 1)

        bucket = ret + jnp.where(is_small, n, val_if_large)   # in [0, num_buckets)

        # Embedding "gather" over the small table: unrolled scalar selects on the
        # strip only (few vregs -> negligible, no spill risk).
        strip = jnp.zeros((8, strip_w), jnp.float32)
        for b in range(num_buckets):
            strip = jnp.where(bucket == b, emb_ref[b], strip)

        # Expand the 1-D (per-sublane) band to the 2-D tile: one static lane-offset
        # slice + one (8, t2_blk) lane-dense store per row-group.
        for r in range(t1_blk // 8):
            off = t1_blk - 8 - 8 * r
            o_ref[8 * r:8 * r + 8, :] = strip[:, off:off + t2_blk]


def t5_rel_position_bias(x, emb_weight, scale, *, causal=False,
                         num_buckets=32, max_distance=128,
                         t1_tile=256, t2_tile=1024):
    """Pallas implementation of T5RelPositionBias.forward.

    Args:
      x: attention scores, (#batch, head, time1, time2) -- only the shape is used.
      emb_weight: Embedding(num_buckets, 1) weight, shape (num_buckets, 1).
      scale: python float (usually query_dim ** 0.5).
    Returns:
      (time1, time2) float32 bias.
    """
    T1, T2 = x.shape[-2], x.shape[-1]

    # Tiles are always (multiple-of-8, multiple-of-128) and capped; the output is
    # padded to tile multiples and sliced afterwards (lane-dense stores, never a
    # single giant block for non-divisible T).
    t1_tile = max(8, (int(t1_tile) // 8) * 8)
    t2_tile = max(128, (int(t2_tile) // 128) * 128)
    t1_blk = min(_round_up(T1, 8), t1_tile)
    t2_blk = min(_round_up(T2, 128), t2_tile)
    T1p = _round_up(T1, t1_blk)
    T2p = _round_up(T2, t2_blk)
    grid = (T1p // t1_blk, T2p // t2_blk)
    strip_w = _round_up(t1_blk - 8 + t2_blk, 128)

    # Pre-scale the tiny table once (removes per-step scalar muls in the kernel).
    emb_scaled = emb_weight.reshape(-1).astype(jnp.float32) * jnp.float32(scale)

    kernel = functools.partial(
        _t5_rel_bias_kernel,
        causal=bool(causal),
        num_buckets=int(num_buckets),
        max_distance=int(max_distance),
        t1_blk=t1_blk,
        t2_blk=t2_blk,
        strip_w=strip_w,
    )

    out = pl.pallas_call(
        kernel,
        out_shape=jax.ShapeDtypeStruct((T1p, T2p), jnp.float32),
        grid=grid,
        in_specs=[pl.BlockSpec(memory_space=pltpu.MemorySpace.SMEM)],  # table
        out_specs=pl.BlockSpec((t1_blk, t2_blk), lambda i, j: (i, j)),
        compiler_params=pltpu.CompilerParams(
            dimension_semantics=("parallel", "parallel")),
    )(emb_scaled)

    if (T1p, T2p) != (T1, T2):
        out = out[:T1, :T2]
    return out


def reference_t5_rel_position_bias(x, emb_weight, scale, causal=False,
                                   num_buckets=32, max_distance=128, nudge=0.0):
    """Plain-JAX reference mirroring the PyTorch forward.

    `nudge` perturbs the value just before truncation; it is only used to make the
    test tolerant to +/-1 ULP differences in log() exactly at bucket boundaries.
    """
    T1, T2 = x.shape[-2], x.shape[-1]
    q_pos = jnp.arange(T1, dtype=jnp.int32)
    k_pos = jnp.arange(T2, dtype=jnp.int32)
    rel_pos = k_pos[None, :] - q_pos[:, None]
    n = -rel_pos

    if not causal:
        nb = num_buckets // 2
        ret = (n < 0).astype(jnp.int32) * nb
        n = jnp.abs(n)
    else:
        nb = num_buckets
        ret = jnp.zeros_like(n)
        n = jnp.maximum(n, 0)

    max_exact = nb // 2
    is_small = n < max_exact
    n_f = jnp.maximum(n.astype(jnp.float32), 1.0)
    frac = (jnp.log(n_f / max_exact)
            / math.log(max_distance / max_exact)
            * (nb - max_exact))
    val_if_large = max_exact + (frac + nudge).astype(jnp.int32)
    val_if_large = jnp.minimum(val_if_large, nb - 1)
    bucket = ret + jnp.where(is_small, n, val_if_large)

    values = emb_weight.reshape(-1)[bucket]
    return values * scale


if __name__ == "__main__":
    NUM_BUCKETS, MAX_DISTANCE = 32, 128

    key0 = jax.random.PRNGKey(0)
    kx, ke = jax.random.split(key0)
    # nn.Embedding(num_buckets, 1).weight ~ N(0, 1) by default.
    emb_weight = jax.random.normal(ke, (NUM_BUCKETS, 1), jnp.float32)

    def check(x, scale, causal):
        out = jax.block_until_ready(
            t5_rel_position_bias(x, emb_weight, scale, causal=causal,
                                 num_buckets=NUM_BUCKETS, max_distance=MAX_DISTANCE))
        T1, T2 = x.shape[-2], x.shape[-1]
        assert out.shape == (T1, T2)
        # Accept either side of the float->int truncation boundary (inherent fp
        # ambiguity of the bucket formula at exact power-of-two distances).
        ok = jnp.zeros(out.shape, bool)
        ref0 = None
        for nudge in (0.0, -1e-4, 1e-4):
            r = reference_t5_rel_position_bias(x, emb_weight, scale, causal,
                                               NUM_BUCKETS, MAX_DISTANCE, nudge)
            if ref0 is None:
                ref0 = r
            ok = ok | jnp.isclose(out, r, rtol=1e-5, atol=1e-5)
        assert bool(jnp.all(ok)), (
            f"max abs err vs ref = {jnp.max(jnp.abs(out - ref0))}")

    # Primary: scores-shaped input as the module receives it
    # (batch=2, head=4, time1=time2=8), scale = d_k ** 0.5.
    x_small = jax.random.normal(kx, (2, 4, 8, 8), jnp.float32)
    check(x_small, scale=math.sqrt(8.0), causal=False)

    # Larger non-causal: sign offset, log buckets, max_distance clamp, T2 padding.
    x_mid = jax.random.normal(kx, (1, 2, 48, 192), jnp.float32)
    check(x_mid, scale=1.0, causal=False)

    # Causal variant: future positions collapse to bucket 0, log buckets for past.
    x_causal = jax.random.normal(kx, (1, 2, 64, 64), jnp.float32)
    check(x_causal, scale=math.sqrt(16.0), causal=True)

    # Wide shape -> grid has a fully-saturated tile; exercises the constant-tile
    # fast path (non-causal far-future bucket 31, causal future bucket 0).
    x_wide = jax.random.normal(kx, (1, 1, 8, 2048), jnp.float32)
    check(x_wide, scale=1.0, causal=False)
    check(x_wide, scale=1.0, causal=True)

    # Tall shape -> saturated far-past tile (bucket num_buckets-1 causal / nb-1 not).
    x_tall = jax.random.normal(kx, (1, 1, 512, 8), jnp.float32)
    check(x_tall, scale=math.sqrt(4.0), causal=True)
    check(x_tall, scale=math.sqrt(4.0), causal=False)

    print("KERNEL_OK")
</pallas_src>

<mosaic_0001>
module attributes {stable_mosaic.version = 11 : i64} {
  func.func @_t5_rel_bias_kernel(%arg0: i32, %arg1: i32, %arg2: memref<32xf32, #tpu.memory_space<smem>>, %arg3: memref<8x128xf32, #tpu.memory_space<vmem>>) attributes {dimension_semantics = [#tpu.dimension_semantics<parallel>, #tpu.dimension_semantics<parallel>], iteration_bounds = array<i64: 1, 1>, scalar_prefetch = 0 : i64, scratch_operands = 0 : i64, tpu.core_type = #tpu.core_type<tc>, window_params = [{transform_indices = @transform_0, window_bounds = array<i64: 32>}, {transform_indices = @transform_1, window_bounds = array<i64: 8, 128>}]} {
    %c8_i32 = arith.constant 8 : i32
    %0 = arith.muli %arg0, %c8_i32 : i32
    %c128_i32 = arith.constant 128 : i32
    %1 = arith.muli %arg1, %c128_i32 : i32
    %2 = arith.subi %0, %1 : i32
    %c127_i32 = arith.constant 127 : i32
    %3 = arith.subi %2, %c127_i32 : i32
    %c7_i32 = arith.constant 7 : i32
    %4 = arith.addi %2, %c7_i32 : i32
    %c128_i32_0 = arith.constant 128 : i32
    %5 = arith.cmpi sge, %3, %c128_i32_0 : i32
    %c-128_i32 = arith.constant -128 : i32
    %6 = arith.cmpi sle, %4, %c-128_i32 : i32
    %c15 = arith.constant 15 : index
    %7 = memref.load %arg2[%c15] : memref<32xf32, #tpu.memory_space<smem>>
    %c31 = arith.constant 31 : index
    %8 = memref.load %arg2[%c31] : memref<32xf32, #tpu.memory_space<smem>>
    %9 = arith.select %5, %7, %8 : f32
    %10 = arith.ori %6, %5 : i1
    %11 = arith.extui %10 : i1 to i32
    %c0_i32 = arith.constant 0 : i32
    %12 = arith.cmpi ne, %11, %c0_i32 : i32
    scf.if %12 {
      %16 = vector.broadcast %9 : f32 to vector<8x128xf32>
      %c0 = arith.constant 0 : index
      %c0_2 = arith.constant 0 : index
      %17 = vector.load %arg3[%c0, %c0_2] : memref<8x128xf32, #tpu.memory_space<vmem>>, vector<8x128xf32>
      tpu.vector_store %arg3[%c0, %c0_2], %16 {strides = array<i32>} : memref<8x128xf32, #tpu.memory_space<vmem>>, vector<8x128xf32>,
    } else {
    }
    %true = arith.constant true
    %13 = arith.xori %10, %true : i1
    %14 = arith.extui %13 : i1 to i32
    %c0_i32_1 = arith.constant 0 : i32
    %15 = arith.cmpi ne, %14, %c0_i32_1 : i32
    scf.if %15 {
      %c0_i32_2 = arith.constant 0 : i32
      %16 = arith.addi %2, %c0_i32_2 : i32
      %17 = tpu.iota {dimensions = array<i32: 0>} : vector<8x128xi32>
      %18 = tpu.iota {dimensions = array<i32: 1>} : vector<8x128xi32>
      %19 = vector.broadcast %16 : i32 to vector<8x128xi32>
      %20 = arith.addi %19, %17 : vector<8x128xi32>
      %21 = arith.subi %20, %18 : vector<8x128xi32>
      %c0_i32_3 = arith.constant 0 : i32
      %22 = vector.broadcast %c0_i32_3 : i32 to vector<8x128xi32>
      %23 = arith.cmpi slt, %21, %22 : vector<8x128xi32>
      %c16_i32 = arith.constant 16 : i32
      %c0_i32_4 = arith.constant 0 : i32
      %24 = vector.broadcast %c16_i32 : i32 to vector<8x128xi32>
      %25 = vector.broadcast %c0_i32_4 : i32 to vector<8x128xi32>
      %26 = arith.select %23, %24, %25 : vector<8x128xi1>, vector<8x128xi32>
      %27 = math.absi %21 : vector<8x128xi32>
      %c8_i32_5 = arith.constant 8 : i32
      %28 = vector.broadcast %c8_i32_5 : i32 to vector<8x128xi32>
      %29 = arith.cmpi slt, %27, %28 : vector<8x128xi32>
      %30 = arith.sitofp %27 : vector<8x128xi32> to vector<8x128xf32>
      %cst = arith.constant 1.000000e+00 : f32
      %31 = vector.broadcast %cst : f32 to vector<8x128xf32>
      %32 = arith.maximumf %30, %31 : vector<8x128xf32>
      %cst_6 = arith.constant 8.000000e+00 : f32
      %33 = vector.broadcast %cst_6 : f32 to vector<8x128xf32>
      %34 = arith.divf %32, %33 : vector<8x128xf32>
      %35 = math.log %34 : vector<8x128xf32>
      %cst_7 = arith.constant 2.77258873 : f32
      %36 = vector.broadcast %cst_7 : f32 to vector<8x128xf32>
      %37 = arith.divf %35, %36 : vector<8x128xf32>
      %cst_8 = arith.constant 8.000000e+00 : f32
      %38 = vector.broadcast %cst_8 : f32 to vector<8x128xf32>
      %39 = arith.mulf %37, %38 : vector<8x128xf32>
      %40 = arith.fptosi %39 : vector<8x128xf32> to vector<8x128xi32>
      %c8_i32_9 = arith.constant 8 : i32
      %41 = vector.broadcast %c8_i32_9 : i32 to vector<8x128xi32>
      %42 = arith.addi %41, %40 : vector<8x128xi32>
      %c15_i32 = arith.constant 15 : i32
      %43 = vector.broadcast %c15_i32 : i32 to vector<8x128xi32>
      %44 = arith.minsi %42, %43 : vector<8x128xi32>
      %45 = arith.select %29, %27, %44 : vector<8x128xi1>, vector<8x128xi32>
      %46 = arith.addi %26, %45 : vector<8x128xi32>
      %cst_10 = arith.constant 0.000000e+00 : f32
      %47 = vector.broadcast %cst_10 : f32 to vector<8x128xf32>
      %c0_i32_11 = arith.constant 0 : i32
      %48 = vector.broadcast %c0_i32_11 : i32 to vector<8x128xi32>
      %49 = arith.cmpi eq, %46, %48 : vector<8x128xi32>
      %c0 = arith.constant 0 : index
      %50 = memref.load %arg2[%c0] : memref<32xf32, #tpu.memory_space<smem>>
      %51 = vector.broadcast %50 : f32 to vector<8x128xf32>
      %52 = arith.select %49, %51, %47 : vector<8x128xi1>, vector<8x128xf32>
      %c1_i32 = arith.constant 1 : i32
      %53 = vector.broadcast %c1_i32 : i32 to vector<8x128xi32>
      %54 = arith.cmpi eq, %46, %53 : vector<8x128xi32>
      %c1 = arith.constant 1 : index
      %55 = memref.load %arg2[%c1] : memref<32xf32, #tpu.memory_space<smem>>
      %56 = vector.broadcast %55 : f32 to vector<8x128xf32>
      %57 = arith.select %54, %56, %52 : vector<8x128xi1>, vector<8x128xf32>
      %c2_i32 = arith.constant 2 : i32
      %58 = vector.broadcast %c2_i32 : i32 to vector<8x128xi32>
      %59 = arith.cmpi eq, %46, %58 : vector<8x128xi32>
      %c2 = arith.constant 2 : index
      %60 = memref.load %arg2[%c2] : memref<32xf32, #tpu.memory_space<smem>>
      %61 = vector.broadcast %60 : f32 to vector<8x128xf32>
      %62 = arith.select %59, %61, %57 : vector<8x128xi1>, vector<8x128xf32>
      %c3_i32 = arith.constant 3 : i32
      %63 = vector.broadcast %c3_i32 : i32 to vector<8x128xi32>
      %64 = arith.cmpi eq, %46, %63 : vector<8x128xi32>
      %c3 = arith.constant 3 : index
      %65 = memref.load %arg2[%c3] : memref<32xf32, #tpu.memory_space<smem>>
      %66 = vector.broadcast %65 : f32 to vector<8x128xf32>
      %67 = arith.select %64, %66, %62 : vector<8x128xi1>, vector<8x128xf32>
      %c4_i32 = arith.constant 4 : i32
      %68 = vector.broadcast %c4_i32 : i32 to vector<8x128xi32>
      %69 = arith.cmpi eq, %46, %68 : vector<8x128xi32>
      %c4 = arith.constant 4 : index
      %70 = memref.load %arg2[%c4] : memref<32xf32, #tpu.memory_space<smem>>
      %71 = vector.broadcast %70 : f32 to vector<8x128xf32>
      %72 = arith.select %69, %71, %67 : vector<8x128xi1>, vector<8x128xf32>
      %c5_i32 = arith.constant 5 : i32
      %73 = vector.broadcast %c5_i32 : i32 to vector<8x128xi32>
      %74 = arith.cmpi eq, %46, %73 : vector<8x128xi32>
      %c5 = arith.constant 5 : index
      %75 = memref.load %arg2[%c5] : memref<32xf32, #tpu.memory_space<smem>>
      %76 = vector.broadcast %75 : f32 to vector<8x128xf32>
      %77 = arith.select %74, %76, %72 : vector<8x128xi1>, vector<8x128xf32>
      %c6_i32 = arith.constant 6 : i32
      %78 = vector.broadcast %c6_i32 : i32 to vector<8x128xi32>
      %79 = arith.cmpi eq, %46, %78 : vector<8x128xi32>
      %c6 = arith.constant 6 : index
      %80 = memref.load %arg2[%c6] : memref<32xf32, #tpu.memory_space<smem>>
      %81 = vector.broadcast %80 : f32 to vector<8x128xf32>
      %82 = arith.select %79, %81, %77 : vector<8x128xi1>, vector<8x128xf32>
      %c7_i32_12 = arith.constant 7 : i32
      %83 = vector.broadcast %c7_i32_12 : i32 to vector<8x128xi32>
      %84 = arith.cmpi eq, %46, %83 : vector<8x128xi32>
      %c7 = arith.constant 7 : index
      %85 = memref.load %arg2[%c7] : memref<32xf32, #tpu.memory_space<smem>>
      %86 = vector.broadcast %85 : f32 to vector<8x128xf32>
      %87 = arith.select %84, %86, %82 : vector<8x128xi1>, vector<8x128xf32>
      %c8_i32_13 = arith.constant 8 : i32
      %88 = vector.broadcast %c8_i32_13 : i32 to vector<8x128xi32>
      %89 = arith.cmpi eq, %46, %88 : vector<8x128xi32>
      %c8 = arith.constant 8 : index
      %90 = memref.load %arg2[%c8] : memref<32xf32, #tpu.memory_space<smem>>
      %91 = vector.broadcast %90 : f32 to vector<8x128xf32>
      %92 = arith.select %89, %91, %87 : vector<8x128xi1>, vector<8x128xf32>
      %c9_i32 = arith.constant 9 : i32
      %93 = vector.broadcast %c9_i32 : i32 to vector<8x128xi32>
      %94 = arith.cmpi eq, %46, %93 : vector<8x128xi32>
      %c9 = arith.constant 9 : index
      %95 = memref.load %arg2[%c9] : memref<32xf32, #tpu.memory_space<smem>>
      %96 = vector.broadcast %95 : f32 to vector<8x128xf32>
      %97 = arith.select %94, %96, %92 : vector<8x128xi1>, vector<8x128xf32>
      %c10_i32 = arith.constant 10 : i32
      %98 = vector.broadcast %c10_i32 : i32 to vector<8x128xi32>
      %99 = arith.cmpi eq, %46, %98 : vector<8x128xi32>
      %c10 = arith.constant 10 : index
      %100 = memref.load %arg2[%c10] : memref<32xf32, #tpu.memory_space<smem>>
      %101 = vector.broadcast %100 : f32 to vector<8x128xf32>
      %102 = arith.select %99, %101, %97 : vector<8x128xi1>, vector<8x128xf32>
      %c11_i32 = arith.constant 11 : i32
      %103 = vector.broadcast %c11_i32 : i32 to vector<8x128xi32>
      %104 = arith.cmpi eq, %46, %103 : vector<8x128xi32>
      %c11 = arith.constant 11 : index
      %105 = memref.load %arg2[%c11] : memref<32xf32, #tpu.memory_space<smem>>
      %106 = vector.broadcast %105 : f32 to vector<8x128xf32>
      %107 = arith.select %104, %106, %102 : vector<8x128xi1>, vector<8x128xf32>
      %c12_i32 = arith.constant 12 : i32
      %108 = vector.broadcast %c12_i32 : i32 to vector<8x128xi32>
      %109 = arith.cmpi eq, %46, %108 : vector<8x128xi32>
      %c12 = arith.constant 12 : index
      %110 = memref.load %arg2[%c12] : memref<32xf32, #tpu.memory_space<smem>>
      %111 = vector.broadcast %110 : f32 to vector<8x128xf32>
      %112 = arith.select %109, %111, %107 : vector<8x128xi1>, vector<8x128xf32>
      %c13_i32 = arith.constant 13 : i32
      %113 = vector.broadcast %c13_i32 : i32 to vector<8x128xi32>
      %114 = arith.cmpi eq, %46, %113 : vector<8x128xi32>
      %c13 = arith.constant 13 : index
      %115 = memref.load %arg2[%c13] : memref<32xf32, #tpu.memory_space<smem>>
      %116 = vector.broadcast %115 : f32 to vector<8x128xf32>
      %117 = arith.select %114, %116, %112 : vector<8x128xi1>, vector<8x128xf32>
      %c14_i32 = arith.constant 14 : i32
      %118 = vector.broadcast %c14_i32 : i32 to vector<8x128xi32>
      %119 = arith.cmpi eq, %46, %118 : vector<8x128xi32>
      %c14 = arith.constant 14 : index
      %120 = memref.load %arg2[%c14] : memref<32xf32, #tpu.memory_space<smem>>
      %121 = vector.broadcast %120 : f32 to vector<8x128xf32>
      %122 = arith.select %119, %121, %117 : vector<8x128xi1>, vector<8x128xf32>
      %c15_i32_14 = arith.constant 15 : i32
      %123 = vector.broadcast %c15_i32_14 : i32 to vector<8x128xi32>
      %124 = arith.cmpi eq, %46, %123 : vector<8x128xi32>
      %c15_15 = arith.constant 15 : index
      %125 = memref.load %arg2[%c15_15] : memref<32xf32, #tpu.memory_space<smem>>
      %126 = vector.broadcast %125 : f32 to vector<8x128xf32>
      %127 = arith.select %124, %126, %122 : vector<8x128xi1>, vector<8x128xf32>
      %c16_i32_16 = arith.constant 16 : i32
      %128 = vector.broadcast %c16_i32_16 : i32 to vector<8x128xi32>
      %129 = arith.cmpi eq, %46, %128 : vector<8x128xi32>
      %c16 = arith.constant 16 : index
      %130 = memref.load %arg2[%c16] : memref<32xf32, #tpu.memory_space<smem>>
      %131 = vector.broadcast %130 : f32 to vector<8x128xf32>
      %132 = arith.select %129, %131, %127 : vector<8x128xi1>, vector<8x128xf32>
      %c17_i32 = arith.constant 17 : i32
      %133 = vector.broadcast %c17_i32 : i32 to vector<8x128xi32>
      %134 = arith.cmpi eq, %46, %133 : vector<8x128xi32>
      %c17 = arith.constant 17 : index
      %135 = memref.load %arg2[%c17] : memref<32xf32, #tpu.memory_space<smem>>
      %136 = vector.broadcast %135 : f32 to vector<8x128xf32>
      %137 = arith.select %134, %136, %132 : vector<8x128xi1>, vector<8x128xf32>
      %c18_i32 = arith.constant 18 : i32
      %138 = vector.broadcast %c18_i32 : i32 to vector<8x128xi32>
      %139 = arith.cmpi eq, %46, %138 : vector<8x128xi32>
      %c18 = arith.constant 18 : index
      %140 = memref.load %arg2[%c18] : memref<32xf32, #tpu.memory_space<smem>>
      %141 = vector.broadcast %140 : f32 to vector<8x128xf32>
      %142 = arith.select %139, %141, %137 : vector<8x128xi1>, vector<8x128xf32>
      %c19_i32 = arith.constant 19 : i32
      %143 = vector.broadcast %c19_i32 : i32 to vector<8x128xi32>
      %144 = arith.cmpi eq, %46, %143 : vector<8x128xi32>
      %c19 = arith.constant 19 : index
      %145 = memref.load %arg2[%c19] : memref<32xf32, #tpu.memory_space<smem>>
      %146 = vector.broadcast %145 : f32 to vector<8x128xf32>
      %147 = arith.select %144, %146, %142 : vector<8x128xi1>, vector<8x128xf32>
      %c20_i32 = arith.constant 20 : i32
      %148 = vector.broadcast %c20_i32 : i32 to vector<8x128xi32>
      %149 = arith.cmpi eq, %46, %148 : vector<8x128xi32>
      %c20 = arith.constant 20 : index
      %150 = memref.load %arg2[%c20] : memref<32xf32, #tpu.memory_space<smem>>
      %151 = vector.broadcast %150 : f32 to vector<8x128xf32>
      %152 = arith.select %149, %151, %147 : vector<8x128xi1>, vector<8x128xf32>
      %c21_i32 = arith.constant 21 : i32
      %153 = vector.broadcast %c21_i32 : i32 to vector<8x128xi32>
      %154 = arith.cmpi eq, %46, %153 : vector<8x128xi32>
      %c21 = arith.constant 21 : index
      %155 = memref.load %arg2[%c21] : memref<32xf32, #tpu.memory_space<smem>>
      %156 = vector.broadcast %155 : f32 to vector<8x128xf32>
      %157 = arith.select %154, %156, %152 : vector<8x128xi1>, vector<8x128xf32>
      %c22_i32 = arith.constant 22 : i32
      %158 = vector.broadcast %c22_i32 : i32 to vector<8x128xi32>
      %159 = arith.cmpi eq, %46, %158 : vector<8x128xi32>
      %c22 = arith.constant 22 : index
      %160 = memref.load %arg2[%c22] : memref<32xf32, #tpu.memory_space<smem>>
      %161 = vector.broadcast %160 : f32 to vector<8x128xf32>
      %162 = arith.select %159, %161, %157 : vector<8x128xi1>, vector<8x128xf32>
      %c23_i32 = arith.constant 23 : i32
      %163 = vector.broadcast %c23_i32 : i32 to vector<8x128xi32>
      %164 = arith.cmpi eq, %46, %163 : vector<8x128xi32>
      %c23 = arith.constant 23 : index
      %165 = memref.load %arg2[%c23] : memref<32xf32, #tpu.memory_space<smem>>
      %166 = vector.broadcast %165 : f32 to vector<8x128xf32>
      %167 = arith.select %164, %166, %162 : vector<8x128xi1>, vector<8x128xf32>
      %c24_i32 = arith.constant 24 : i32
      %168 = vector.broadcast %c24_i32 : i32 to vector<8x128xi32>
      %169 = arith.cmpi eq, %46, %168 : vector<8x128xi32>
      %c24 = arith.constant 24 : index
      %170 = memref.load %arg2[%c24] : memref<32xf32, #tpu.memory_space<smem>>
      %171 = vector.broadcast %170 : f32 to vector<8x128xf32>
      %172 = arith.select %169, %171, %167 : vector<8x128xi1>, vector<8x128xf32>
      %c25_i32 = arith.constant 25 : i32
      %173 = vector.broadcast %c25_i32 : i32 to vector<8x128xi32>
      %174 = arith.cmpi eq, %46, %173 : vector<8x128xi32>
      %c25 = arith.constant 25 : index
      %175 = memref.load %arg2[%c25] : memref<32xf32, #tpu.memory_space<smem>>
      %176 = vector.broadcast %175 : f32 to vector<8x128xf32>
      %177 = arith.select %174, %176, %172 : vector<8x128xi1>, vector<8x128xf32>
      %c26_i32 = arith.constant 26 : i32
      %178 = vector.broadcast %c26_i32 : i32 to vector<8x128xi32>
      %179 = arith.cmpi eq, %46, %178 : vector<8x128xi32>
      %c26 = arith.constant 26 : index
      %180 = memref.load %arg2[%c26] : memref<32xf32, #tpu.memory_space<smem>>
      %181 = vector.broadcast %180 : f32 to vector<8x128xf32>
      %182 = arith.select %179, %181, %177 : vector<8x128xi1>, vector<8x128xf32>
      %c27_i32 = arith.constant 27 : i32
      %183 = vector.broadcast %c27_i32 : i32 to vector<8x128xi32>
      %184 = arith.cmpi eq, %46, %183 : vector<8x128xi32>
      %c27 = arith.constant 27 : index
      %185 = memref.load %arg2[%c27] : memref<32xf32, #tpu.memory_space<smem>>
      %186 = vector.broadcast %185 : f32 to vector<8x128xf32>
      %187 = arith.select %184, %186, %182 : vector<8x128xi1>, vector<8x128xf32>
      %c28_i32 = arith.constant 28 : i32
      %188 = vector.broadcast %c28_i32 : i32 to vector<8x128xi32>
      %189 = arith.cmpi eq, %46, %188 : vector<8x128xi32>
      %c28 = arith.constant 28 : index
      %190 = memref.load %arg2[%c28] : memref<32xf32, #tpu.memory_space<smem>>
      %191 = vector.broadcast %190 : f32 to vector<8x128xf32>
      %192 = arith.select %189, %191, %187 : vector<8x128xi1>, vector<8x128xf32>
      %c29_i32 = arith.constant 29 : i32
      %193 = vector.broadcast %c29_i32 : i32 to vector<8x128xi32>
      %194 = arith.cmpi eq, %46, %193 : vector<8x128xi32>
      %c29 = arith.constant 29 : index
      %195 = memref.load %arg2[%c29] : memref<32xf32, #tpu.memory_space<smem>>
      %196 = vector.broadcast %195 : f32 to vector<8x128xf32>
      %197 = arith.select %194, %196, %192 : vector<8x128xi1>, vector<8x128xf32>
      %c30_i32 = arith.constant 30 : i32
      %198 = vector.broadcast %c30_i32 : i32 to vector<8x128xi32>
      %199 = arith.cmpi eq, %46, %198 : vector<8x128xi32>
      %c30 = arith.constant 30 : index
      %200 = memref.load %arg2[%c30] : memref<32xf32, #tpu.memory_space<smem>>
      %201 = vector.broadcast %200 : f32 to vector<8x128xf32>
      %202 = arith.select %199, %201, %197 : vector<8x128xi1>, vector<8x128xf32>
      %c31_i32 = arith.constant 31 : i32
      %203 = vector.broadcast %c31_i32 : i32 to vector<8x128xi32>
      %204 = arith.cmpi eq, %46, %203 : vector<8x128xi32>
      %c31_17 = arith.constant 31 : index
      %205 = memref.load %arg2[%c31_17] : memref<32xf32, #tpu.memory_space<smem>>
      %206 = vector.broadcast %205 : f32 to vector<8x128xf32>
      %207 = arith.select %204, %206, %202 : vector<8x128xi1>, vector<8x128xf32>
      %c0_18 = arith.constant 0 : index
      %c0_19 = arith.constant 0 : index
      %208 = vector.load %arg3[%c0_18, %c0_19] : memref<8x128xf32, #tpu.memory_space<vmem>>, vector<8x128xf32>
      tpu.vector_store %arg3[%c0_18, %c0_19], %207 {strides = array<i32>} : memref<8x128xf32, #tpu.memory_space<vmem>>, vector<8x128xf32>,
    } else {
    }
    return
  }
  func.func @transform_0(%arg0: i32, %arg1: i32) -> i32 {
    %c0_i32 = arith.constant 0 : i32
    %c0_i32_0 = arith.constant 0 : i32
    return %c0_i32 : i32
  }
  func.func @transform_1(%arg0: i32, %arg1: i32) -> (i32, i32) {
    %c0_i32 = arith.constant 0 : i32
    return %arg0, %arg1 : i32, i32
  }
}

</mosaic_0001>

<llo_original>
// kernel: tpu_custom_call.1
$region0: #{tpu_custom_call.1}
  #allocation0 [shape = 'u32[]', space=smem, size = 0x4, offset = 0x4, fixed_abs, tag = 'smem constant byte address 0x4 - core index']
  #allocation1 [shape = 'u32[144,128]{1,0:T(1,128)}', space=vmem, size = 0x12000, scoped, tag = 'internal scratch']
  %s0 = inlined_call_operand.hbm [shape: f32[32], index: 0, kind: input, shape index: {}]
  %s1 = inlined_call_operand.hbm [shape: f32[8,128], index: 1, kind: output, shape index: {}]
  %s2 = sld [smem:[#allocation0]]
  $region26: #{tpu_custom_call.1} parent=0
    _
  %s4 = ssub.s32 1, %s2
  %s5 = scalar_select 0, %s4, %s2
  $region1: #{tpu_custom_call.1} parent=0
    #allocation2 [shape = 'u8[512]{0}', space=smem, size = 0x200, scoped, tag = 'input window, operand 0, single buffered']
    #allocation3 [shape = 's32[1]{0}', space=sflag, size = 0x4, scoped, tag = 'scoped memory for tpu_custom_call.1']
    #allocation4 [shape = 's32[1]{0}', space=sflag, size = 0x4, scoped, tag = 'scoped memory for tpu_custom_call.1']
    #allocation5 [shape = 'u8[4096]{0}', space=vmem, size = 0x1000, scoped, tag = 'output window, operand 0, single buffered']
    %6 = vsyncpa [#allocation4], 0
    %7 = vsyncpa [#allocation3], 0
    // Predicated region
    $region2: #{tpu_custom_call.1} parent=1 // pred_check
      _
    $region3: #{tpu_custom_call.1} parent=1 // pred_check_branch
      %9 = sbr.rel (0) target = $region5
    $region4: #{tpu_custom_call.1} parent=1 // pred_region
      %s11 = ssub.s32 16, 16
      %12 = vsyncadd [#allocation4], %s11
      %15 = dma.hbm_to_smem %s0, 16, [#allocation2], [#allocation4]
    $region5: #{tpu_custom_call.1} parent=1 // pred_fallthru
      _
    // Predicated region
    $region6: #{tpu_custom_call.1} parent=1 // pred_check
      _
    $region7: #{tpu_custom_call.1} parent=1 // pred_check_branch
      %17 = sbr.rel (0) target = $region9
    $region8: #{tpu_custom_call.1} parent=1 // pred_region
      %18 = dma.done [#allocation4], 16
    $region9: #{tpu_custom_call.1} parent=1 // pred_fallthru
      _
    %19 = sfence
    %s20 = smul.u32 0, 8
    %s21 = smul.u32 0, 128
    %s22 = ssub.s32 %s20, %s21
    %s23 = ssub.s32 %s22, 127
    %s24 = sadd.s32 %s22, 7
    %p25 = scmp.ge.s32.totalorder %s23, 128
    %p26 = scmp.le.s32.totalorder %s24, 4294967168
    %s27 = sld [smem:[#allocation2 + $0xf]]
    %s28 = sld [smem:[#allocation2 + $0x1f]]
    %s29 = scalar_select %p25, %s27, %s28
    %p30 = por %p26, %p25
    // Predicated region
    $region10: #{tpu_custom_call.1} parent=1 // pred_check
      %p31 = pneg %p30
    $region11: #{tpu_custom_call.1} parent=1 // pred_check_branch
      %33 = sbr.rel (%p31) target = $region13
    $region12: #{tpu_custom_call.1} parent=1 // pred_region
      %v34 = vstv %s29
      %35 = vst [vmem:[#allocation5] sm:$0xff] %v34
    $region13: #{tpu_custom_call.1} parent=1 // pred_fallthru
      _
    %p36 = pneg %p30
    // Predicated region
    $region14: #{tpu_custom_call.1} parent=1 // pred_check
      _
    $region15: #{tpu_custom_call.1} parent=1 // pred_check_branch
      %38 = sbr.rel (%p30) target = $region17
    $region16: #{tpu_custom_call.1} parent=1 // pred_region
      %v39 = vlaneseq
      %v40 = vshrl.u32 %v39, 7
      %v41 = vlaneseq
      %v42 = vand.u32 %v41, 127
      %v43 = vstv %s22
      %v44 = vadd.s32 %v43, %v40
      %v45 = vsub.s32 %v44, %v42
      %vm46 = vcmp.lt.s32.totalorder %v45, 0
      %v47 = vsel %vm46, 16, 0
      %v48 = vsub.s32 0, %v45
      %v49 = vsel %vm46, %v48, %v45
      %vm50 = vcmp.lt.s32.totalorder %v49, 8
      %v51 = vcvt.s32.f32 %v49
      %v52 = vmax.f32 %v51, 1.0
      %v53 = vrcp.pop 8.0
      %v54 = vmul.f32 %v52, %v53
      %v55 = vlog2.pop %v54
      %v56 = vmul.f32 %v55, 0.6931472
      %v57 = vrcp.pop 2.7725887
      %v58 = vmul.f32 %v56, %v57
      %v59 = vmul.f32 %v58, 8.0
      %v60 = vcvt.f32.s32.to.zero.pseudo %v59
      %v61 = vadd.s32 %v60, 8
      %vm62 = vcmp.lt.s32.totalorder %v61, 15
      %v63 = vsel %vm62, %v61, 15
      %v64 = vsel %vm50, %v49, %v63
      %v65 = vadd.s32 %v47, %v64
      %vm66 = vcmp.eq.s32.totalorder %v65, 0
      %s67 = sld [smem:[#allocation2]]
      %v68 = vstv %s67
      %v69 = vsel %vm66, %v68, 0.0
      %vm70 = vcmp.eq.s32.totalorder %v65, 1
      %s71 = sld [smem:[#allocation2 + $0x1]]
      %v72 = vstv %s71
      %v73 = vsel %vm70, %v72, %v69
      %vm74 = vcmp.eq.s32.totalorder %v65, 2
      %s75 = sld [smem:[#allocation2 + $0x2]]
      %v76 = vstv %s75
      %v77 = vsel %vm74, %v76, %v73
      %vm78 = vcmp.eq.s32.totalorder %v65, 3
      %s79 = sld [smem:[#allocation2 + $0x3]]
      %v80 = vstv %s79
      %v81 = vsel %vm78, %v80, %v77
      %vm82 = vcmp.eq.s32.totalorder %v65, 4
      %s83 = sld [smem:[#allocation2 + $0x4]]
      %v84 = vstv %s83
      %v85 = vsel %vm82, %v84, %v81
      %vm86 = vcmp.eq.s32.totalorder %v65, 5
      %s87 = sld [smem:[#allocation2 + $0x5]]
      %v88 = vstv %s87
      %v89 = vsel %vm86, %v88, %v85
      %vm90 = vcmp.eq.s32.totalorder %v65, 6
      %s91 = sld [smem:[#allocation2 + $0x6]]
      %v92 = vstv %s91
      %v93 = vsel %vm90, %v92, %v89
      %vm94 = vcmp.eq.s32.totalorder %v65, 7
      %s95 = sld [smem:[#allocation2 + $0x7]]
      %v96 = vstv %s95
      %v97 = vsel %vm94, %v96, %v93
      %vm98 = vcmp.eq.s32.totalorder %v65, 8
      %s99 = sld [smem:[#allocation2 + $0x8]]
      %v100 = vstv %s99
      %v101 = vsel %vm98, %v100, %v97
      %vm102 = vcmp.eq.s32.totalorder %v65, 9
      %s103 = sld [smem:[#allocation2 + $0x9]]
      %v104 = vstv %s103
      %v105 = vsel %vm102, %v104, %v101
      %vm106 = vcmp.eq.s32.totalorder %v65, 10
      %s107 = sld [smem:[#allocation2 + $0xa]]
      %v108 = vstv %s107
      %v109 = vsel %vm106, %v108, %v105
      %vm110 = vcmp.eq.s32.totalorder %v65, 11
      %s111 = sld [smem:[#allocation2 + $0xb]]
      %v112 = vstv %s111
      %v113 = vsel %vm110, %v112, %v109
      %vm114 = vcmp.eq.s32.totalorder %v65, 12
      %s115 = sld [smem:[#allocation2 + $0xc]]
      %v116 = vstv %s115
      %v117 = vsel %vm114, %v116, %v113
      %vm118 = vcmp.eq.s32.totalorder %v65, 13
      %s119 = sld [smem:[#allocation2 + $0xd]]
      %v120 = vstv %s119
      %v121 = vsel %vm118, %v120, %v117
      %vm122 = vcmp.eq.s32.totalorder %v65, 14
      %s123 = sld [smem:[#allocation2 + $0xe]]
      %v124 = vstv %s123
      %v125 = vsel %vm122, %v124, %v121
      %vm126 = vcmp.eq.s32.totalorder %v65, 15
      %s127 = sld [smem:[#allocation2 + $0xf]]
      %v128 = vstv %s127
      %v129 = vsel %vm126, %v128, %v125
      %vm130 = vcmp.eq.s32.totalorder %v65, 16
      %s131 = sld [smem:[#allocation2 + $0x10]]
      %v132 = vstv %s131
      %v133 = vsel %vm130, %v132, %v129
      %vm134 = vcmp.eq.s32.totalorder %v65, 17
      %s135 = sld [smem:[#allocation2 + $0x11]]
      %v136 = vstv %s135
      %v137 = vsel %vm134, %v136, %v133
      %vm138 = vcmp.eq.s32.totalorder %v65, 18
      %s139 = sld [smem:[#allocation2 + $0x12]]
      %v140 = vstv %s139
      %v141 = vsel %vm138, %v140, %v137
      %vm142 = vcmp.eq.s32.totalorder %v65, 19
      %s143 = sld [smem:[#allocation2 + $0x13]]
      %v144 = vstv %s143
      %v145 = vsel %vm142, %v144, %v141
      %vm146 = vcmp.eq.s32.totalorder %v65, 20
      %s147 = sld [smem:[#allocation2 + $0x14]]
      %v148 = vstv %s147
      %v149 = vsel %vm146, %v148, %v145
      %vm150 = vcmp.eq.s32.totalorder %v65, 21
      %s151 = sld [smem:[#allocation2 + $0x15]]
      %v152 = vstv %s151
      %v153 = vsel %vm150, %v152, %v149
      %vm154 = vcmp.eq.s32.totalorder %v65, 22
      %s155 = sld [smem:[#allocation2 + $0x16]]
      %v156 = vstv %s155
      %v157 = vsel %vm154, %v156, %v153
      %vm158 = vcmp.eq.s32.totalorder %v65, 23
      %s159 = sld [smem:[#allocation2 + $0x17]]
      %v160 = vstv %s159
      %v161 = vsel %vm158, %v160, %v157
      %vm162 = vcmp.eq.s32.totalorder %v65, 24
      %s163 = sld [smem:[#allocation2 + $0x18]]
      %v164 = vstv %s163
      %v165 = vsel %vm162, %v164, %v161
      %vm166 = vcmp.eq.s32.totalorder %v65, 25
      %s167 = sld [smem:[#allocation2 + $0x19]]
      %v168 = vstv %s167
      %v169 = vsel %vm166, %v168, %v165
      %vm170 = vcmp.eq.s32.totalorder %v65, 26
      %s171 = sld [smem:[#allocation2 + $0x1a]]
      %v172 = vstv %s171
      %v173 = vsel %vm170, %v172, %v169
      %vm174 = vcmp.eq.s32.totalorder %v65, 27
      %s175 = sld [smem:[#allocation2 + $0x1b]]
      %v176 = vstv %s175
      %v177 = vsel %vm174, %v176, %v173
      %vm178 = vcmp.eq.s32.totalorder %v65, 28
      %s179 = sld [smem:[#allocation2 + $0x1c]]
      %v180 = vstv %s179
      %v181 = vsel %vm178, %v180, %v177
      %vm182 = vcmp.eq.s32.totalorder %v65, 29
      %s183 = sld [smem:[#allocation2 + $0x1d]]
      %v184 = vstv %s183
      %v185 = vsel %vm182, %v184, %v181
      %vm186 = vcmp.eq.s32.totalorder %v65, 30
      %s187 = sld [smem:[#allocation2 + $0x1e]]
      %v188 = vstv %s187
      %v189 = vsel %vm186, %v188, %v185
      %vm190 = vcmp.eq.s32.totalorder %v65, 31
      %s191 = sld [smem:[#allocation2 + $0x1f]]
      %v192 = vstv %s191
      %v193 = vsel %vm190, %v192, %v189
      %194 = vst [vmem:[#allocation5] sm:$0xff] %v193
    $region17: #{tpu_custom_call.1} parent=1 // pred_fallthru
      _
    // Predicated region
    $region18: #{tpu_custom_call.1} parent=1 // pred_check
      _
    $region19: #{tpu_custom_call.1} parent=1 // pred_check_branch
      %196 = sbr.rel (0) target = $region21
    $region20: #{tpu_custom_call.1} parent=1 // pred_region
      %s198 = ssub.s32 128, 128
      %199 = vsyncadd [#allocation3], %s198
      %s201 = sshll.u32 [#allocation5], 4
      %s202 = int_to_ptr.vmem [resolvable:$true] %s201
      %204 = dma.vmem_to_hbm [thread:$0]  %s202, 128, %s1, [#allocation3]
    $region21: #{tpu_custom_call.1} parent=1 // pred_fallthru
      _
    // Predicated region
    $region22: #{tpu_custom_call.1} parent=1 // pred_check
      _
    $region23: #{tpu_custom_call.1} parent=1 // pred_check_branch
      %206 = sbr.rel (0) target = $region25
    $region24: #{tpu_custom_call.1} parent=1 // pred_region
      %207 = dma.done [#allocation3], 128
    $region25: #{tpu_custom_call.1} parent=1 // pred_fallthru
      _
    %208 = vsyncpa [#allocation3], 1
    %209 = vsyncpa [#allocation4], 1

</llo_original>
